<compile_context>
chip_gen: v5e
topology: v5e:2x2
jax: 0.10.0
libtpu: 0.0.40
codegen_flags: <defaults>
</compile_context>

<pallas_src>
import functools

import jax
import jax.numpy as jnp
from jax.experimental import pallas as pl
from jax.experimental.pallas import tpu as pltpu


def _disc_kernel(h_ref, x_ref, out_ref, *, tn, n_cols, ragged):
    """Grid = (H-tiles [parallel], N-tiles [arbitrary reduction]).

    h_ref  : (th, 1)  f32   column vector h = summary @ W
    x_ref  : (th, tn)       tile of x in native layout (N on lanes)
    out_ref: (th, 1)  f32   resident accumulator / final result
    """
    j = pl.program_id(1)

    @pl.when(j == 0)
    def _():
        out_ref[...] = jnp.zeros_like(out_ref)

    xt = x_ref[...].astype(jnp.float32)
    if ragged:
        # Mask lanes past the true N (only the last N-tile has any).
        col = j * tn + jax.lax.broadcasted_iota(jnp.int32, xt.shape, 1)
        xt = jnp.where(col < n_cols, xt, 0.0)

    out_ref[...] += jnp.sum(xt, axis=1, keepdims=True)

    @pl.when(j == pl.num_programs(1) - 1)
    def _():
        out_ref[...] *= h_ref[...]


def _round_up(a, b):
    return (a + b - 1) // b * b


def _choose_tiles(H, N, itemsize):
    # Sublane (H) tile: keep full H unless it is very large.
    th = H if H <= 512 else 512
    # Lane (N) tile: ~4 MiB per x buffer (2x double-buffered -> ~8 MiB),
    # comfortably inside v5e's 16 MiB default scoped VMEM and v7x's 64 MiB.
    if N <= 128:
        tn = N  # single full block along N
    else:
        budget = 4 * 1024 * 1024
        max_tn = max(128, (budget // (th * itemsize)) // 128 * 128)
        tn = min(_round_up(N, 128), max_tn)
    return th, tn


@jax.jit
def discriminator_forward(x, summary, weight):
    """x: (H, N), summary: (H,), weight: (H, H)  ->  (H,)"""
    H, N = x.shape
    assert weight.shape == (H, H) and summary.shape == (H,)

    out_dtype = jnp.result_type(x.dtype, summary.dtype, weight.dtype)

    # Tiny mem-bound matvec; done by XLA so W never occupies kernel VMEM.
    h = jnp.dot(summary, weight, preferred_element_type=jnp.float32)
    h = h.reshape(H, 1).astype(jnp.float32)

    th, tn = _choose_tiles(H, N, x.dtype.itemsize)
    gh = pl.cdiv(H, th)
    gn = pl.cdiv(N, tn)
    ragged = (N % tn) != 0

    kernel = functools.partial(_disc_kernel, tn=tn, n_cols=N, ragged=ragged)

    # Explicit VMEM budget: double-buffered x tile + h/out blocks + margin,
    # floored/capped to stay safe on v5e (16 MiB default) and v7x (64 MiB).
    x_tile_bytes = th * tn * x.dtype.itemsize
    vmem_limit = max(16 * 1024 * 1024,
                     min(48 * 1024 * 1024,
                         2 * x_tile_bytes + 8 * th * 4 + (2 << 20)))

    out = pl.pallas_call(
        kernel,
        out_shape=jax.ShapeDtypeStruct((H, 1), jnp.float32),
        grid=(gh, gn),
        in_specs=[
            pl.BlockSpec((th, 1), lambda i, j: (i, 0)),    # h (column vector)
            pl.BlockSpec((th, tn), lambda i, j: (i, j)),   # x, native layout
        ],
        out_specs=pl.BlockSpec((th, 1), lambda i, j: (i, 0)),
        compiler_params=pltpu.CompilerParams(
            dimension_semantics=("parallel", "arbitrary"),
            vmem_limit_bytes=int(vmem_limit),
        ),
    )(h, x)

    return out.reshape(H).astype(out_dtype)


def _reference(x, summary, weight):
    # Exact PyTorch semantics in plain JAX (for verification).
    h = jnp.matmul(summary, weight).reshape(-1, 1)   # (H, 1)
    return jnp.sum(x * h, axis=1)                    # (H,)


def init_weight(key, hidden_dim):
    # torch_geometric.nn.inits.uniform: U(-1/sqrt(size), 1/sqrt(size)), size = hidden_dim
    bound = 1.0 / jnp.sqrt(jnp.float32(hidden_dim))
    return jax.random.uniform(
        key, (hidden_dim, hidden_dim), dtype=jnp.float32, minval=-bound, maxval=bound
    )


if __name__ == "__main__":
    hidden_dim = 32   # H
    n_cols = 64       # N (original x dim=1, the reduced axis)

    key = jax.random.PRNGKey(0)
    k_w, k_x, k_s = jax.random.split(key, 3)

    weight = init_weight(k_w, hidden_dim)                                   # (H, H)
    x = jax.random.normal(k_x, (hidden_dim, n_cols), dtype=jnp.float32)     # (H, N)
    summary = jax.random.normal(k_s, (hidden_dim,), dtype=jnp.float32)      # (H,)

    out = discriminator_forward(x, summary, weight)
    out = jax.block_until_ready(out)

    ref = _reference(x, summary, weight)
    assert out.shape == (hidden_dim,)
    assert jnp.allclose(out, ref, atol=1e-5, rtol=1e-5), (out, ref)

    print("KERNEL_OK")
</pallas_src>

<mosaic_0001>
module attributes {stable_mosaic.version = 11 : i64} {
  func.func @_disc_kernel(%arg0: i32, %arg1: i32, %arg2: memref<32x1xf32, #tpu.memory_space<vmem>>, %arg3: memref<32x64xf32, #tpu.memory_space<vmem>>, %arg4: memref<32x1xf32, #tpu.memory_space<vmem>>) attributes {dimension_semantics = [#tpu.dimension_semantics<parallel>, #tpu.dimension_semantics<arbitrary>], iteration_bounds = array<i64: 1, 1>, scalar_prefetch = 0 : i64, scratch_operands = 0 : i64, tpu.core_type = #tpu.core_type<tc>, window_params = [{transform_indices = @transform_0, window_bounds = array<i64: 32, 1>}, {transform_indices = @transform_1, window_bounds = array<i64: 32, 64>}, {transform_indices = @transform_2, window_bounds = array<i64: 32, 1>}]} {
    %c0_i32 = arith.constant 0 : i32
    %0 = arith.cmpi eq, %arg1, %c0_i32 : i32
    %1 = arith.extui %0 : i1 to i32
    %c0_i32_0 = arith.constant 0 : i32
    %2 = arith.cmpi ne, %1, %c0_i32_0 : i32
    scf.if %2 {
      %cst_8 = arith.constant 0.000000e+00 : f32
      %12 = vector.broadcast %cst_8 : f32 to vector<32x1xf32>
      %c0_9 = arith.constant 0 : index
      %c0_10 = arith.constant 0 : index
      %13 = vector.load %arg4[%c0_9, %c0_10] : memref<32x1xf32, #tpu.memory_space<vmem>>, vector<32x1xf32>
      tpu.vector_store %arg4[%c0_9, %c0_10], %12 {strides = array<i32>} : memref<32x1xf32, #tpu.memory_space<vmem>>, vector<32x1xf32>,
    } else {
    }
    %c0 = arith.constant 0 : index
    %c0_1 = arith.constant 0 : index
    %3 = vector.load %arg3[%c0, %c0_1] : memref<32x64xf32, #tpu.memory_space<vmem>>, vector<32x64xf32>
    %c0_2 = arith.constant 0 : index
    %c0_3 = arith.constant 0 : index
    %4 = vector.load %arg4[%c0_2, %c0_3] : memref<32x1xf32, #tpu.memory_space<vmem>>, vector<32x1xf32>
    %cst = arith.constant dense<0.000000e+00> : vector<32xf32>
    %5 = vector.multi_reduction <add>, %3, %cst [1] : vector<32x64xf32> to vector<32xf32>
    %6 = vector.shape_cast %5 : vector<32xf32> to vector<32x1xf32>
    %7 = arith.addf %4, %6 : vector<32x1xf32>
    %c0_4 = arith.constant 0 : index
    %c0_5 = arith.constant 0 : index
    %8 = vector.load %arg4[%c0_4, %c0_5] : memref<32x1xf32, #tpu.memory_space<vmem>>, vector<32x1xf32>
    tpu.vector_store %arg4[%c0_4, %c0_5], %7 {strides = array<i32>} : memref<32x1xf32, #tpu.memory_space<vmem>>, vector<32x1xf32>,
    %c0_i32_6 = arith.constant 0 : i32
    %9 = arith.cmpi eq, %arg1, %c0_i32_6 : i32
    %10 = arith.extui %9 : i1 to i32
    %c0_i32_7 = arith.constant 0 : i32
    %11 = arith.cmpi ne, %10, %c0_i32_7 : i32
    scf.if %11 {
      %c0_8 = arith.constant 0 : index
      %c0_9 = arith.constant 0 : index
      %12 = vector.load %arg4[%c0_8, %c0_9] : memref<32x1xf32, #tpu.memory_space<vmem>>, vector<32x1xf32>
      %c0_10 = arith.constant 0 : index
      %c0_11 = arith.constant 0 : index
      %13 = vector.load %arg2[%c0_10, %c0_11] : memref<32x1xf32, #tpu.memory_space<vmem>>, vector<32x1xf32>
      %14 = arith.mulf %12, %13 : vector<32x1xf32>
      %c0_12 = arith.constant 0 : index
      %c0_13 = arith.constant 0 : index
      %15 = vector.load %arg4[%c0_12, %c0_13] : memref<32x1xf32, #tpu.memory_space<vmem>>, vector<32x1xf32>
      tpu.vector_store %arg4[%c0_12, %c0_13], %14 {strides = array<i32>} : memref<32x1xf32, #tpu.memory_space<vmem>>, vector<32x1xf32>,
    } else {
    }
    return
  }
  func.func @transform_0(%arg0: i32, %arg1: i32) -> (i32, i32) {
    %c0_i32 = arith.constant 0 : i32
    %c0_i32_0 = arith.constant 0 : i32
    return %arg0, %c0_i32 : i32, i32
  }
  func.func @transform_1(%arg0: i32, %arg1: i32) -> (i32, i32) {
    %c0_i32 = arith.constant 0 : i32
    return %arg0, %arg1 : i32, i32
  }
  func.func @transform_2(%arg0: i32, %arg1: i32) -> (i32, i32) {
    %c0_i32 = arith.constant 0 : i32
    %c0_i32_0 = arith.constant 0 : i32
    return %arg0, %c0_i32 : i32, i32
  }
}

</mosaic_0001>

<llo_original>
// kernel: discriminator_forward.1
$region0: #{discriminator_forward.1}
  #allocation0 [shape = 'u32[]', space=smem, size = 0x4, offset = 0x4, fixed_abs, tag = 'smem constant byte address 0x4 - core index']
  #allocation1 [shape = 'u32[72,128]{1,0:T(1,128)}', space=vmem, size = 0x9000, scoped, tag = 'internal scratch']
  %s0 = inlined_call_operand.vmem [shape: f32[32,1], index: 0, kind: input, shape index: {}]
  %s1 = inlined_call_operand.vmem [shape: f32[32,64], index: 1, kind: input, shape index: {}]
  %s2 = inlined_call_operand.vmem [shape: f32[32,1], index: 2, kind: output, shape index: {}]
  %s3 = sld [smem:[#allocation0]]
  $region26: #{discriminator_forward.1} parent=0
    _
  %s5 = ssub.s32 1, %s3
  %s6 = scalar_select 0, %s5, %s3
  // Predicated region
  $region2: #{discriminator_forward.1} parent=0 // pred_check
    _
  $region3: #{discriminator_forward.1} parent=0 // pred_check_branch
    %8 = sbr.rel (0) target = $region5
  $region4: #{discriminator_forward.1} parent=0 // pred_region
    _
  $region5: #{discriminator_forward.1} parent=0 // pred_fallthru
    _
  // Predicated region
  $region6: #{discriminator_forward.1} parent=0 // pred_check
    _
  $region7: #{discriminator_forward.1} parent=0 // pred_check_branch
    %10 = sbr.rel (0) target = $region9
  $region8: #{discriminator_forward.1} parent=0 // pred_region
    _
  $region9: #{discriminator_forward.1} parent=0 // pred_fallthru
    _
  %p11 = scmp.eq.s32.totalorder 0, 0
  // Predicated region
  $region10: #{discriminator_forward.1} parent=0 // pred_check
    %p12 = pneg %p11
  $region11: #{discriminator_forward.1} parent=0 // pred_check_branch
    %14 = sbr.rel (%p12) target = $region13
  $region12: #{discriminator_forward.1} parent=0 // pred_region
    %vm15 = vcmask 7168
    %16 = vst.msk [vmem:[%s2] sm:$0xff] %vm15, 0.0
    %17 = vst.msk [vmem:[%s2 + $0x8] sm:$0xff] %vm15, 0.0
    %18 = vst.msk [vmem:[%s2 + $0x10] sm:$0xff] %vm15, 0.0
    %19 = vst.msk [vmem:[%s2 + $0x18] sm:$0xff] %vm15, 0.0
  $region13: #{discriminator_forward.1} parent=0 // pred_fallthru
    _
  %v20 = vld [vmem:[%s1] sm:$0xff]
  %v21 = vld [vmem:[%s1 + $0x8] sm:$0xff]
  %v22 = vld [vmem:[%s1 + $0x10] sm:$0xff]
  %v23 = vld [vmem:[%s1 + $0x18] sm:$0xff]
  %v24 = vld [vmem:[%s2] sm:$0xff]
  %v25 = vld [vmem:[%s2 + $0x8] sm:$0xff]
  %v26 = vld [vmem:[%s2 + $0x10] sm:$0xff]
  %v27 = vld [vmem:[%s2 + $0x18] sm:$0xff]
  %vm28 = vcmask 523264
  %v29 = vsel %vm28, %v20, 0.0
  %30 = vadd.xlane.f32.xlu0 %v29
  %v31 = vpop.xlane.xlu0 %30
  %v32 = vsel %vm28, %v21, 0.0
  %33 = vadd.xlane.f32.xlu0 %v32
  %v34 = vpop.xlane.xlu0 %33
  %v35 = vsel %vm28, %v22, 0.0
  %36 = vadd.xlane.f32.xlu0 %v35
  %v37 = vpop.xlane.xlu0 %36
  %v38 = vsel %vm28, %v23, 0.0
  %39 = vadd.xlane.f32.xlu0 %v38
  %v40 = vpop.xlane.xlu0 %39
  %v41 = vadd.f32 %v24, %v31
  %v42 = vadd.f32 %v25, %v34
  %v43 = vadd.f32 %v26, %v37
  %v44 = vadd.f32 %v27, %v40
  %vm45 = vcmask 7168
  %46 = vst.msk [vmem:[%s2] sm:$0xff] %vm45, %v41
  %47 = vst.msk [vmem:[%s2 + $0x8] sm:$0xff] %vm45, %v42
  %48 = vst.msk [vmem:[%s2 + $0x10] sm:$0xff] %vm45, %v43
  %49 = vst.msk [vmem:[%s2 + $0x18] sm:$0xff] %vm45, %v44
  // Predicated region
  $region14: #{discriminator_forward.1} parent=0 // pred_check
    %p50 = pneg %p11
  $region15: #{discriminator_forward.1} parent=0 // pred_check_branch
    %52 = sbr.rel (%p50) target = $region17
  $region16: #{discriminator_forward.1} parent=0 // pred_region
    %v53 = vld [vmem:[%s2] sm:$0xff]
    %v54 = vld [vmem:[%s2 + $0x8] sm:$0xff]
    %v55 = vld [vmem:[%s2 + $0x10] sm:$0xff]
    %v56 = vld [vmem:[%s2 + $0x18] sm:$0xff]
    %v57 = vld [vmem:[%s0] sm:$0xff]
    %v58 = vld [vmem:[%s0 + $0x8] sm:$0xff]
    %v59 = vld [vmem:[%s0 + $0x10] sm:$0xff]
    %v60 = vld [vmem:[%s0 + $0x18] sm:$0xff]
    %v61 = vmul.f32 %v53, %v57
    %v62 = vmul.f32 %v54, %v58
    %v63 = vmul.f32 %v55, %v59
    %v64 = vmul.f32 %v56, %v60
    %65 = vst.msk [vmem:[%s2] sm:$0xff] %vm45, %v61
    %66 = vst.msk [vmem:[%s2 + $0x8] sm:$0xff] %vm45, %v62
    %67 = vst.msk [vmem:[%s2 + $0x10] sm:$0xff] %vm45, %v63
    %68 = vst.msk [vmem:[%s2 + $0x18] sm:$0xff] %vm45, %v64
  $region17: #{discriminator_forward.1} parent=0 // pred_fallthru
    _
  // Predicated region
  $region18: #{discriminator_forward.1} parent=0 // pred_check
    _
  $region19: #{discriminator_forward.1} parent=0 // pred_check_branch
    %70 = sbr.rel (0) target = $region21
  $region20: #{discriminator_forward.1} parent=0 // pred_region
    _
  $region21: #{discriminator_forward.1} parent=0 // pred_fallthru
    _
  // Predicated region
  $region22: #{discriminator_forward.1} parent=0 // pred_check
    _
  $region23: #{discriminator_forward.1} parent=0 // pred_check_branch
    %72 = sbr.rel (0) target = $region25
  $region24: #{discriminator_forward.1} parent=0 // pred_region
    _
  $region25: #{discriminator_forward.1} parent=0 // pred_fallthru
    _

</llo_original>
